<compile_context>
chip_gen: v7x
topology: tpu7x:2x2x1
jax: 0.10.0
libtpu: 0.0.40
codegen_flags: <defaults>
</compile_context>

<pallas_src>
import jax
import jax.numpy as jnp
import numpy as np
from jax.experimental import pallas as pl
from jax.experimental.pallas import tpu as pltpu


def _round_up(x, m):
    return ((x + m - 1) // m) * m


def _vmem_limit_bytes(tile_io_elems, dims):
    """Conservative VMEM budget (double-buffered I/O tiles + resident weights)."""
    weight_elems = sum(ci * co + co for ci, co in dims)
    est = 4 * (2 * tile_io_elems + 2 * weight_elems)
    est = int(est * 4) + (8 << 20)           # headroom for intermediates/scratch
    # Keep within v7x's 64 MiB physical VMEM; at least the 32 MiB default scope.
    return max(32 << 20, min(est, 48 << 20))


def _cost_estimate(rows, dims):
    cin0, cout_last = dims[0][0], dims[-1][1]
    flops = 2 * rows * sum(ci * co for ci, co in dims)
    bytes_accessed = 4 * (rows * cin0 + rows * cout_last
                          + sum(ci * co + co for ci, co in dims))
    return pl.CostEstimate(flops=flops, transcendentals=0,
                           bytes_accessed=bytes_accessed)


# ----------------------------------------------------------------------------
# Fused multi-layer kernels
# ----------------------------------------------------------------------------
def _make_row_kernel(dims, resi):
    """Feature-last layout: x tile is (TILE_M, Cin); per layer y = relu(x@Wt + b)."""
    L = len(dims)

    def kernel(*refs):
        x_ref = refs[0]
        w_refs = refs[1:1 + L]            # (cin, cout) each, BN-folded
        b_refs = refs[1 + L:1 + 2 * L]    # (1, cout) each, BN-folded
        o_ref = refs[1 + 2 * L]
        h = x_ref[...].astype(jnp.float32)
        for l, (cin, cout) in enumerate(dims):
            inp = h
            h = jnp.dot(h, w_refs[l][...], preferred_element_type=jnp.float32)
            h = h + b_refs[l][...]
            h = jnp.maximum(h, 0.0)
            if resi and cin == cout:      # torch: residual added AFTER ReLU
                h = h + inp
        o_ref[...] = h.astype(o_ref.dtype)

    return kernel


def _make_col_kernel(dims, resi):
    """Channel-first layout: x tile is (Cin, TILE_S); per layer y = relu(W@x + b)."""
    L = len(dims)

    def kernel(*refs):
        x_ref = refs[0]
        w_refs = refs[1:1 + L]            # (cout, cin) each, BN-folded
        b_refs = refs[1 + L:1 + 2 * L]    # (cout, 1) each, BN-folded
        o_ref = refs[1 + 2 * L]
        h = x_ref[...].astype(jnp.float32)
        for l, (cin, cout) in enumerate(dims):
            inp = h
            h = jnp.dot(w_refs[l][...], h, preferred_element_type=jnp.float32)
            h = h + b_refs[l][...]
            h = jnp.maximum(h, 0.0)
            if resi and cin == cout:
                h = h + inp
        o_ref[...] = h.astype(o_ref.dtype)

    return kernel


# ----------------------------------------------------------------------------
# pallas_call wrappers
# ----------------------------------------------------------------------------
def _run_rows(x2d, folded, dims, *, resi):
    """x2d: (M, Cin0) float32. Single fused call, grid over M tiles."""
    M, cin0 = x2d.shape
    cout_last = dims[-1][1]

    tile_m = min(1024, _round_up(M, 8))
    grid = (pl.cdiv(M, tile_m),)

    wts = [jnp.asarray(w).T.astype(jnp.float32) for (w, _) in folded]      # (cin, cout)
    bs = [jnp.asarray(b).reshape(1, -1).astype(jnp.float32) for (_, b) in folded]

    in_specs = [pl.BlockSpec((tile_m, cin0), lambda i: (i, 0))]
    for (cin, cout) in dims:                                   # VMEM-resident weights
        in_specs.append(pl.BlockSpec((cin, cout), lambda i: (0, 0)))
    for (_, cout) in dims:                                     # VMEM-resident biases
        in_specs.append(pl.BlockSpec((1, cout), lambda i: (0, 0)))
    out_spec = pl.BlockSpec((tile_m, cout_last), lambda i: (i, 0))

    return pl.pallas_call(
        _make_row_kernel(tuple(dims), resi),
        out_shape=jax.ShapeDtypeStruct((M, cout_last), jnp.float32),
        grid=grid,
        in_specs=in_specs,
        out_specs=out_spec,
        compiler_params=pltpu.CompilerParams(
            dimension_semantics=("parallel",),
            vmem_limit_bytes=_vmem_limit_bytes(tile_m * (cin0 + cout_last), dims)),
        cost_estimate=_cost_estimate(M, dims),
    )(x2d, *wts, *bs)


def _run_cols(x3, folded, dims, *, resi):
    """x3: (N, Cin0, S) float32 channel-first. No transpose; spatial axis on lanes."""
    N, cin0, S = x3.shape
    cout_last = dims[-1][1]

    tile_s = S if S <= 512 else 512          # full dim or a multiple of 128
    grid = (N, pl.cdiv(S, tile_s))

    ws = [jnp.asarray(w).astype(jnp.float32) for (w, _) in folded]          # (cout, cin)
    bs = [jnp.asarray(b).reshape(-1, 1).astype(jnp.float32) for (_, b) in folded]

    in_specs = [pl.BlockSpec((None, cin0, tile_s), lambda n, s: (n, 0, s))]
    for (cin, cout) in dims:
        in_specs.append(pl.BlockSpec((cout, cin), lambda n, s: (0, 0)))
    for (_, cout) in dims:
        in_specs.append(pl.BlockSpec((cout, 1), lambda n, s: (0, 0)))
    out_spec = pl.BlockSpec((None, cout_last, tile_s), lambda n, s: (n, 0, s))

    return pl.pallas_call(
        _make_col_kernel(tuple(dims), resi),
        out_shape=jax.ShapeDtypeStruct((N, cout_last, S), jnp.float32),
        grid=grid,
        in_specs=in_specs,
        out_specs=out_spec,
        compiler_params=pltpu.CompilerParams(
            dimension_semantics=("parallel", "parallel"),
            vmem_limit_bytes=_vmem_limit_bytes(tile_s * (cin0 + cout_last), dims)),
        cost_estimate=_cost_estimate(N * S, dims),
    )(x3, *ws, *bs)


# ----------------------------------------------------------------------------
# Parameter init (deterministic, mirrors PyTorch Conv1d + BatchNorm shapes)
# ----------------------------------------------------------------------------
def init_params(key, channels):
    params = []
    for cin, cout in zip(channels, channels[1:]):
        key, k1, k2, k3, k4 = jax.random.split(key, 5)
        bound = 1.0 / np.sqrt(cin)
        params.append(dict(
            w=jax.random.uniform(k1, (cout, cin), jnp.float32, -bound, bound),
            b=jax.random.uniform(k2, (cout,), jnp.float32, -bound, bound),
            gamma=jax.random.uniform(k3, (cout,), jnp.float32, 0.5, 1.5),
            beta=jax.random.uniform(k4, (cout,), jnp.float32, -0.5, 0.5),
            mean=jnp.zeros((cout,), jnp.float32),
            var=jnp.ones((cout,), jnp.float32),
        ))
    return params


# ----------------------------------------------------------------------------
# Forward pass (matches MLP_md.forward semantics)
# ----------------------------------------------------------------------------
def mlp_md_forward(x, params, *, resi=False, feature_last=True, eps=1e-5):
    x = jnp.asarray(x, jnp.float32)
    dims = [(int(p["w"].shape[1]), int(p["w"].shape[0])) for p in params]

    # Fold eval-mode BatchNorm into conv weight/bias:  W' = W*scale, b' = (b-mean)*scale + beta
    folded = []
    for p in params:
        scale = p["gamma"] / jnp.sqrt(p["var"] + eps)
        w = p["w"] * scale[:, None]
        b = (p["b"] - p["mean"]) * scale + p["beta"]
        folded.append((w, b))

    if x.ndim == 2:
        # torch path: unsqueeze(-1) -> conv1x1 -> squeeze(-1)  ==  dense layer on (N, C)
        return _run_rows(x, folded, dims, resi=resi)

    if feature_last:
        # (N, *spatial, C): flatten leading dims (free reshape, no transpose)
        lead = x.shape[:-1]
        out2 = _run_rows(x.reshape(-1, x.shape[-1]), folded, dims, resi=resi)
        return out2.reshape(lead + (out2.shape[-1],))

    # channel-first (N, C, *spatial): keep layout, avoid moveaxis round trip
    N, C = x.shape[0], x.shape[1]
    spatial = x.shape[2:]
    S = int(np.prod(spatial))
    out3 = _run_cols(x.reshape(N, C, S), folded, dims, resi=resi)
    return out3.reshape((N, out3.shape[1]) + spatial)


# ----------------------------------------------------------------------------
# Pure-JAX reference (direct transcription of the torch forward, md=1)
# ----------------------------------------------------------------------------
def ref_forward(x, params, *, resi=False, feature_last=True, eps=1e-5):
    x = jnp.asarray(x, jnp.float32)
    twoD = (x.ndim == 2)
    if twoD:
        feature_last = False
        x = x[..., None]
    if feature_last:
        x = jnp.swapaxes(x, 1, -1)            # (N, L, C) -> (N, C, L)
    for p in params:
        inp = x if resi else None
        x = jnp.einsum("ncl,oc->nol", x, p["w"]) + p["b"][None, :, None]
        scale = p["gamma"] / jnp.sqrt(p["var"] + eps)
        shift = p["beta"] - p["mean"] * scale
        x = x * scale[None, :, None] + shift[None, :, None]
        x = jnp.maximum(x, 0.0)
        if inp is not None and x.shape == inp.shape:
            x = x + inp
    if feature_last:
        x = jnp.swapaxes(x, 1, -1)
    if twoD:
        x = x[..., 0]
    return x


if __name__ == "__main__":
    key = jax.random.PRNGKey(0)
    channels = [4, 32, 32]                     # Conv1d(4->32, 1), Conv1d(32->32, 1)
    kp, kx1, kx2, kx3 = jax.random.split(key, 4)
    params = init_params(kp, channels)

    # 1) feature-last input (batch=2, seq=16, channels=4), no residual
    x_fl = jax.random.normal(kx1, (2, 16, 4), jnp.float32)
    out = jax.block_until_ready(mlp_md_forward(x_fl, params, resi=False, feature_last=True))
    ref = ref_forward(x_fl, params, resi=False, feature_last=True)
    assert out.shape == (2, 16, 32), out.shape
    np.testing.assert_allclose(np.asarray(out), np.asarray(ref), rtol=1e-5, atol=2e-5)

    # 2) channel-first input (batch=2, channels=4, seq=16), with residual (layer 2: 32->32)
    x_cf = jax.random.normal(kx2, (2, 4, 16), jnp.float32)
    out = jax.block_until_ready(mlp_md_forward(x_cf, params, resi=True, feature_last=False))
    ref = ref_forward(x_cf, params, resi=True, feature_last=False)
    assert out.shape == (2, 32, 16), out.shape
    np.testing.assert_allclose(np.asarray(out), np.asarray(ref), rtol=1e-5, atol=2e-5)

    # 3) 2-D input (batch=8, channels=4) -> torch unsqueeze/squeeze path
    x_2d = jax.random.normal(kx3, (8, 4), jnp.float32)
    out = jax.block_until_ready(mlp_md_forward(x_2d, params, resi=False))
    ref = ref_forward(x_2d, params, resi=False)
    assert out.shape == (8, 32), out.shape
    np.testing.assert_allclose(np.asarray(out), np.asarray(ref), rtol=1e-5, atol=2e-5)

    print("KERNEL_OK")
</pallas_src>

<mosaic_0001>
module attributes {stable_mosaic.version = 11 : i64} {
  func.func @kernel(%arg0: i32, %arg1: memref<32x4xf32, #tpu.memory_space<vmem>>, %arg2: memref<4x32xf32, #tpu.memory_space<vmem>>, %arg3: memref<32x32xf32, #tpu.memory_space<vmem>>, %arg4: memref<1x32xf32, #tpu.memory_space<vmem>>, %arg5: memref<1x32xf32, #tpu.memory_space<vmem>>, %arg6: memref<32x32xf32, #tpu.memory_space<vmem>>) attributes {dimension_semantics = [#tpu.dimension_semantics<parallel>], iteration_bounds = array<i64: 1>, scalar_prefetch = 0 : i64, scratch_operands = 0 : i64, tpu.core_type = #tpu.core_type<tc>, window_params = [{transform_indices = @transform_0, window_bounds = array<i64: 32, 4>}, {pipeline_mode = #tpu.pipeline_mode<synchronous>, transform_indices = @transform_1, window_bounds = array<i64: 4, 32>}, {pipeline_mode = #tpu.pipeline_mode<synchronous>, transform_indices = @transform_2, window_bounds = array<i64: 32, 32>}, {pipeline_mode = #tpu.pipeline_mode<synchronous>, transform_indices = @transform_3, window_bounds = array<i64: 1, 32>}, {pipeline_mode = #tpu.pipeline_mode<synchronous>, transform_indices = @transform_4, window_bounds = array<i64: 1, 32>}, {transform_indices = @transform_5, window_bounds = array<i64: 32, 32>}]} {
    %c0 = arith.constant 0 : index
    %c0_0 = arith.constant 0 : index
    %0 = vector.load %arg1[%c0, %c0_0] : memref<32x4xf32, #tpu.memory_space<vmem>>, vector<32x4xf32>
    %c0_1 = arith.constant 0 : index
    %c0_2 = arith.constant 0 : index
    %1 = vector.load %arg2[%c0_1, %c0_2] : memref<4x32xf32, #tpu.memory_space<vmem>>, vector<4x32xf32>
    %cst = arith.constant dense<0.000000e+00> : vector<32x32xf32>
    %2 = tpu.matmul %0, %1, %cst {dimension_numbers = #tpu.dot_dimension_numbers<[1], [0], [0], [1], [0, 0, 1, 1], [], []>} : vector<32x4xf32>, vector<4x32xf32>, vector<32x32xf32> -> vector<32x32xf32>
    %c0_3 = arith.constant 0 : index
    %c0_4 = arith.constant 0 : index
    %3 = vector.load %arg4[%c0_3, %c0_4] : memref<1x32xf32, #tpu.memory_space<vmem>>, vector<1x32xf32>
    %4 = vector.broadcast %3 : vector<1x32xf32> to vector<32x32xf32>
    %5 = arith.addf %2, %4 : vector<32x32xf32>
    %cst_5 = arith.constant 0.000000e+00 : f32
    %6 = vector.broadcast %cst_5 : f32 to vector<32x32xf32>
    %7 = arith.maximumf %5, %6 : vector<32x32xf32>
    %c0_6 = arith.constant 0 : index
    %c0_7 = arith.constant 0 : index
    %8 = vector.load %arg3[%c0_6, %c0_7] : memref<32x32xf32, #tpu.memory_space<vmem>>, vector<32x32xf32>
    %cst_8 = arith.constant dense<0.000000e+00> : vector<32x32xf32>
    %9 = tpu.matmul %7, %8, %cst_8 {dimension_numbers = #tpu.dot_dimension_numbers<[1], [0], [0], [1], [0, 0, 1, 1], [], []>} : vector<32x32xf32>, vector<32x32xf32>, vector<32x32xf32> -> vector<32x32xf32>
    %c0_9 = arith.constant 0 : index
    %c0_10 = arith.constant 0 : index
    %10 = vector.load %arg5[%c0_9, %c0_10] : memref<1x32xf32, #tpu.memory_space<vmem>>, vector<1x32xf32>
    %11 = vector.broadcast %10 : vector<1x32xf32> to vector<32x32xf32>
    %12 = arith.addf %9, %11 : vector<32x32xf32>
    %cst_11 = arith.constant 0.000000e+00 : f32
    %13 = vector.broadcast %cst_11 : f32 to vector<32x32xf32>
    %14 = arith.maximumf %12, %13 : vector<32x32xf32>
    %c0_12 = arith.constant 0 : index
    %c0_13 = arith.constant 0 : index
    %15 = vector.load %arg6[%c0_12, %c0_13] : memref<32x32xf32, #tpu.memory_space<vmem>>, vector<32x32xf32>
    tpu.vector_store %arg6[%c0_12, %c0_13], %14 {strides = array<i32>} : memref<32x32xf32, #tpu.memory_space<vmem>>, vector<32x32xf32>,
    return
  }
  func.func @transform_0(%arg0: i32) -> (i32, i32) {
    %c0_i32 = arith.constant 0 : i32
    %c0_i32_0 = arith.constant 0 : i32
    return %arg0, %c0_i32 : i32, i32
  }
  func.func @transform_1(%arg0: i32) -> (i32, i32) {
    %c0_i32 = arith.constant 0 : i32
    %c0_i32_0 = arith.constant 0 : i32
    %c0_i32_1 = arith.constant 0 : i32
    return %c0_i32, %c0_i32_0 : i32, i32
  }
  func.func @transform_2(%arg0: i32) -> (i32, i32) {
    %c0_i32 = arith.constant 0 : i32
    %c0_i32_0 = arith.constant 0 : i32
    %c0_i32_1 = arith.constant 0 : i32
    return %c0_i32, %c0_i32_0 : i32, i32
  }
  func.func @transform_3(%arg0: i32) -> (i32, i32) {
    %c0_i32 = arith.constant 0 : i32
    %c0_i32_0 = arith.constant 0 : i32
    %c0_i32_1 = arith.constant 0 : i32
    return %c0_i32, %c0_i32_0 : i32, i32
  }
  func.func @transform_4(%arg0: i32) -> (i32, i32) {
    %c0_i32 = arith.constant 0 : i32
    %c0_i32_0 = arith.constant 0 : i32
    %c0_i32_1 = arith.constant 0 : i32
    return %c0_i32, %c0_i32_0 : i32, i32
  }
  func.func @transform_5(%arg0: i32) -> (i32, i32) {
    %c0_i32 = arith.constant 0 : i32
    %c0_i32_0 = arith.constant 0 : i32
    return %arg0, %c0_i32 : i32, i32
  }
}

</mosaic_0001>

<llo_original>
// kernel: tpu_custom_call.1
$region0: #{tpu_custom_call.1}
  #allocation0 [shape = 'u32[]', space=smem, size = 0x4, offset = 0x4, fixed_abs, tag = 'smem constant byte address 0x4 - core index']
  #allocation1 [shape = 'u32[144,128]{1,0:T(1,128)}', space=vmem, size = 0x12000, scoped, tag = 'internal scratch']
  %s0 = inlined_call_operand.vmem [shape: f32[32,4], index: 0, kind: input, shape index: {}]
  %s1 = inlined_call_operand.vmem [shape: f32[4,32], index: 1, kind: input, shape index: {}]
  %s2 = inlined_call_operand.vmem [shape: f32[32,32], index: 2, kind: input, shape index: {}]
  %s3 = inlined_call_operand.vmem [shape: f32[1,32], index: 3, kind: input, shape index: {}]
  %s4 = inlined_call_operand.vmem [shape: f32[1,32], index: 4, kind: input, shape index: {}]
  %s5 = inlined_call_operand.hbm [shape: f32[32,32], index: 5, kind: output, shape index: {}]
  %s6 = sld [smem:[#allocation0]]
  $region30: #{tpu_custom_call.1} parent=0
    _
  %s8 = ssub.s32 1, %s6
  %s9 = scalar_select 0, %s8, %s6
  $region1: #{tpu_custom_call.1} parent=0
    #allocation2 [shape = 'u8[16384]{0}', space=vmem, size = 0x4000, scoped, tag = 'output window, operand 0, single buffered']
    #allocation3 [shape = 's32[1]{0}', space=sflag, size = 0x4, scoped, tag = 'scoped memory for tpu_custom_call.1']
    %10 = vsyncpa [#allocation3], 0
    // Predicated region
    $region2: #{tpu_custom_call.1} parent=1 // pred_check
      _
    $region3: #{tpu_custom_call.1} parent=1 // pred_check_branch
      %12 = sbr.rel (0) target = $region5
    $region4: #{tpu_custom_call.1} parent=1 // pred_region
      _
    $region5: #{tpu_custom_call.1} parent=1 // pred_fallthru
      _
    // Predicated region
    $region6: #{tpu_custom_call.1} parent=1 // pred_check
      _
    $region7: #{tpu_custom_call.1} parent=1 // pred_check_branch
      %14 = sbr.rel (0) target = $region9
    $region8: #{tpu_custom_call.1} parent=1 // pred_region
      _
    $region9: #{tpu_custom_call.1} parent=1 // pred_fallthru
      _
    // Predicated region
    $region10: #{tpu_custom_call.1} parent=1 // pred_check
      _
    $region11: #{tpu_custom_call.1} parent=1 // pred_check_branch
      %16 = sbr.rel (0) target = $region13
    $region12: #{tpu_custom_call.1} parent=1 // pred_region
      _
    $region13: #{tpu_custom_call.1} parent=1 // pred_fallthru
      _
    // Predicated region
    $region14: #{tpu_custom_call.1} parent=1 // pred_check
      _
    $region15: #{tpu_custom_call.1} parent=1 // pred_check_branch
      %18 = sbr.rel (0) target = $region17
    $region16: #{tpu_custom_call.1} parent=1 // pred_region
      _
    $region17: #{tpu_custom_call.1} parent=1 // pred_fallthru
      _
    // Predicated region
    $region18: #{tpu_custom_call.1} parent=1 // pred_check
      _
    $region19: #{tpu_custom_call.1} parent=1 // pred_check_branch
      %20 = sbr.rel (0) target = $region21
    $region20: #{tpu_custom_call.1} parent=1 // pred_region
      _
    $region21: #{tpu_custom_call.1} parent=1 // pred_fallthru
      _
    %v21 = vld [vmem:[%s0] sm:$0xff]
    %v22 = vld [vmem:[%s0 + $0x8] sm:$0xff]
    %v23 = vld [vmem:[%s0 + $0x10] sm:$0xff]
    %v24 = vld [vmem:[%s0 + $0x18] sm:$0xff]
    %v25 = vld [vmem:[%s1] sm:$0xf]
    %v26 = vld [vmem:[%s3] sm:$0x1]
    %v28 = vlaneseq
    %v29 = vshrl.u32 %v28, 7
    %v30 = vsub.s32 0, %v29
    %v31 = vrot.slane %v26, %v30
    %vm33 = vcmask 31744
    %v35 = vsel %vm33, %v21, 0
    %v38 = vsel %vm33, %v22, 0
    %v41 = vsel %vm33, %v23, 0
    %v44 = vsel %vm33, %v24, 0
    %vm46 = vcmask 1043456
    %v48 = vsel %vm46, %v25, 0
    %50 = vmatprep.subr.mxu0 0.0
    %51 = vmatpush1.msra.mxu0 %v48
    %52 = vmatprep.subr.mxu0 0.0
    %53 = vmatpush1.msra.mxu0 0.0
    %54 = vmatprep.subr.mxu0 0.0
    %55 = vmatpush1.msra.mxu0 0.0
    %56 = vmatprep.subr.mxu0 0.0
    %57 = vmatpush1.msra.mxu0 0.0
    %58 = vmatprep.subr.mxu0 0.0
    %59 = vmatpush1.msra.mxu0 0.0
    %60 = vmatprep.subr.mxu0 0.0
    %61 = vmatpush1.msra.mxu0 0.0
    %62 = vmatprep.subr.mxu0 0.0
    %63 = vmatpush1.msra.mxu0 0.0
    %64 = vmatprep.subr.mxu0 0.0
    %65 = vmatpush1.msra.mxu0 0.0
    %66 = vmatprep.subr.mxu0 0.0
    %67 = vmatpush1.msra.mxu0 0.0
    %68 = vmatprep.subr.mxu0 0.0
    %69 = vmatpush1.msra.mxu0 0.0
    %70 = vmatprep.subr.mxu0 0.0
    %71 = vmatpush1.msra.mxu0 0.0
    %72 = vmatprep.subr.mxu0 0.0
    %73 = vmatpush1.msra.mxu0 0.0
    %74 = vmatprep.subr.mxu0 0.0
    %75 = vmatpush1.msra.mxu0 0.0
    %76 = vmatprep.subr.mxu0 0.0
    %77 = vmatpush1.msra.mxu0 0.0
    %78 = vmatprep.subr.mxu0 0.0
    %79 = vmatpush1.msra.mxu0 0.0
    %80 = vmatprep.subr.mxu0 0.0
    %81 = vmatpush1.msra.mxu0 0.0
    %82 = vmatprep.subr.mxu0 0.0
    %83 = vmatpush1.msra.mxu0 0.0
    %84 = vmatprep.subr.mxu0 0.0
    %85 = vmatpush1.msra.mxu0 0.0
    %86 = vmatprep.subr.mxu0 0.0
    %87 = vmatpush1.msra.mxu0 0.0
    %88 = vmatprep.subr.mxu0 0.0
    %89 = vmatpush1.msra.mxu0 0.0
    %90 = vmatprep.subr.mxu0 0.0
    %91 = vmatpush1.msra.mxu0 0.0
    %92 = vmatprep.subr.mxu0 0.0
    %93 = vmatpush1.msra.mxu0 0.0
    %94 = vmatprep.subr.mxu0 0.0
    %95 = vmatpush1.msra.mxu0 0.0
    %96 = vmatprep.subr.mxu0 0.0
    %97 = vmatpush1.msra.mxu0 0.0
    %98 = vmatprep.subr.mxu0 0.0
    %99 = vmatpush1.msra.mxu0 0.0
    %100 = vmatprep.subr.mxu0 0.0
    %101 = vmatpush1.msra.mxu0 0.0
    %102 = vmatprep.subr.mxu0 0.0
    %103 = vmatpush1.msra.mxu0 0.0
    %104 = vmatprep.subr.mxu0 0.0
    %105 = vmatpush1.msra.mxu0 0.0
    %106 = vmatprep.subr.mxu0 0.0
    %107 = vmatpush1.msra.mxu0 0.0
    %108 = vmatprep.subr.mxu0 0.0
    %109 = vmatpush1.msra.mxu0 0.0
    %110 = vmatprep.subr.mxu0 0.0
    %111 = vmatpush1.msra.mxu0 0.0
    %112 = vmatprep.subr.mxu0 0.0
    %113 = vmatpush1.msra.mxu0 0.0
    %114 = vmatprep.mubr.f32.mxu0 0.0
    %115 = vmatmul.mubr.f32.gmra.mrb[0].mxu0 %v35
    %v116 = vpop.f32.mrb[0].mxu0
    %v117 = vadd.f32 %v31, %v116
    %v118 = vpop.f32.mrb[0].mxu0
    %119 = vmatprep.mubr.f32.mxu0 0.0
    %120 = vmatmul.mubr.f32.gmra.mrb[0].mxu0 %v38
    %v121 = vpop.f32.mrb[0].mxu0
    %v122 = vadd.f32 %v31, %v121
    %v123 = vpop.f32.mrb[0].mxu0
    %124 = vmatprep.mubr.f32.mxu0 0.0
    %125 = vmatmul.mubr.f32.gmra.mrb[0].mxu0 %v41
    %v126 = vpop.f32.mrb[0].mxu0
    %v127 = vadd.f32 %v31, %v126
    %v128 = vpop.f32.mrb[0].mxu0
    %129 = vmatprep.mubr.f32.mxu0 0.0
    %130 = vmatmul.mubr.f32.gmra.mrb[0].mxu0 %v44
    %v131 = vpop.f32.mrb[0].mxu0
    %v132 = vadd.f32 %v31, %v131
    %v133 = vpop.f32.mrb[0].mxu0
    %134 = vdwg.mxu0
    %v135 = vmax.f32 %v117, 0.0
    %v136 = vmax.f32 %v122, 0.0
    %v137 = vmax.f32 %v127, 0.0
    %v138 = vmax.f32 %v132, 0.0
    %v139 = vld [vmem:[%s2] sm:$0xff]
    %v140 = vld [vmem:[%s2 + $0x8] sm:$0xff]
    %v141 = vld [vmem:[%s2 + $0x10] sm:$0xff]
    %v142 = vld [vmem:[%s2 + $0x18] sm:$0xff]
    %v143 = vld [vmem:[%s4] sm:$0x1]
    %v145 = vlaneseq
    %v146 = vshrl.u32 %v145, 7
    %v147 = vsub.s32 0, %v146
    %v148 = vrot.slane %v143, %v147
    %vm150 = vcmask 261120
    %v152 = vsel %vm150, %v135, 0
    %v155 = vsel %vm150, %v136, 0
    %v158 = vsel %vm150, %v137, 0
    %v161 = vsel %vm150, %v138, 0
    %163 = vmatprep.subr.mxu0 0.0
    %164 = vmatpush1.msra.mxu0 %v139
    %165 = vmatprep.subr.mxu0 0.0
    %166 = vmatpush1.msra.mxu0 %v140
    %167 = vmatprep.subr.mxu0 0.0
    %168 = vmatpush1.msra.mxu0 %v141
    %169 = vmatprep.subr.mxu0 0.0
    %170 = vmatpush1.msra.mxu0 %v142
    %171 = vmatprep.subr.mxu0 0.0
    %172 = vmatpush1.msra.mxu0 0.0
    %173 = vmatprep.subr.mxu0 0.0
    %174 = vmatpush1.msra.mxu0 0.0
    %175 = vmatprep.subr.mxu0 0.0
    %176 = vmatpush1.msra.mxu0 0.0
    %177 = vmatprep.subr.mxu0 0.0
    %178 = vmatpush1.msra.mxu0 0.0
    %179 = vmatprep.subr.mxu0 0.0
    %180 = vmatpush1.msra.mxu0 0.0
    %181 = vmatprep.subr.mxu0 0.0
    %182 = vmatpush1.msra.mxu0 0.0
    %183 = vmatprep.subr.mxu0 0.0
    %184 = vmatpush1.msra.mxu0 0.0
    %185 = vmatprep.subr.mxu0 0.0
    %186 = vmatpush1.msra.mxu0 0.0
    %187 = vmatprep.subr.mxu0 0.0
    %188 = vmatpush1.msra.mxu0 0.0
    %189 = vmatprep.subr.mxu0 0.0
    %190 = vmatpush1.msra.mxu0 0.0
    %191 = vmatprep.subr.mxu0 0.0
    %192 = vmatpush1.msra.mxu0 0.0
    %193 = vmatprep.subr.mxu0 0.0
    %194 = vmatpush1.msra.mxu0 0.0
    %195 = vmatprep.subr.mxu0 0.0
    %196 = vmatpush1.msra.mxu0 0.0
    %197 = vmatprep.subr.mxu0 0.0
    %198 = vmatpush1.msra.mxu0 0.0
    %199 = vmatprep.subr.mxu0 0.0
    %200 = vmatpush1.msra.mxu0 0.0
    %201 = vmatprep.subr.mxu0 0.0
    %202 = vmatpush1.msra.mxu0 0.0
    %203 = vmatprep.subr.mxu0 0.0
    %204 = vmatpush1.msra.mxu0 0.0
    %205 = vmatprep.subr.mxu0 0.0
    %206 = vmatpush1.msra.mxu0 0.0
    %207 = vmatprep.subr.mxu0 0.0
    %208 = vmatpush1.msra.mxu0 0.0
    %209 = vmatprep.subr.mxu0 0.0
    %210 = vmatpush1.msra.mxu0 0.0
    %211 = vmatprep.subr.mxu0 0.0
    %212 = vmatpush1.msra.mxu0 0.0
    %213 = vmatprep.subr.mxu0 0.0
    %214 = vmatpush1.msra.mxu0 0.0
    %215 = vmatprep.subr.mxu0 0.0
    %216 = vmatpush1.msra.mxu0 0.0
    %217 = vmatprep.subr.mxu0 0.0
    %218 = vmatpush1.msra.mxu0 0.0
    %219 = vmatprep.subr.mxu0 0.0
    %220 = vmatpush1.msra.mxu0 0.0
    %221 = vmatprep.subr.mxu0 0.0
    %222 = vmatpush1.msra.mxu0 0.0
    %223 = vmatprep.subr.mxu0 0.0
    %224 = vmatpush1.msra.mxu0 0.0
    %225 = vmatprep.subr.mxu0 0.0
    %226 = vmatpush1.msra.mxu0 0.0
    %227 = vmatprep.mubr.f32.mxu0 0.0
    %228 = vmatmul.mubr.f32.gmra.mrb[0].mxu0 %v152
    %v229 = vpop.f32.mrb[0].mxu0
    %v230 = vadd.f32 %v148, %v229
    %v231 = vpop.f32.mrb[0].mxu0
    %232 = vmatprep.mubr.f32.mxu0 0.0
    %233 = vmatmul.mubr.f32.gmra.mrb[0].mxu0 %v155
    %v234 = vpop.f32.mrb[0].mxu0
    %v235 = vadd.f32 %v148, %v234
    %v236 = vpop.f32.mrb[0].mxu0
    %237 = vmatprep.mubr.f32.mxu0 0.0
    %238 = vmatmul.mubr.f32.gmra.mrb[0].mxu0 %v158
    %v239 = vpop.f32.mrb[0].mxu0
    %v240 = vadd.f32 %v148, %v239
    %v241 = vpop.f32.mrb[0].mxu0
    %242 = vmatprep.mubr.f32.mxu0 0.0
    %243 = vmatmul.mubr.f32.gmra.mrb[0].mxu0 %v161
    %v244 = vpop.f32.mrb[0].mxu0
    %v245 = vadd.f32 %v148, %v244
    %v246 = vpop.f32.mrb[0].mxu0
    %247 = vdwg.mxu0
    %v248 = vmax.f32 %v230, 0.0
    %v249 = vmax.f32 %v235, 0.0
    %v250 = vmax.f32 %v240, 0.0
    %v251 = vmax.f32 %v245, 0.0
    %252 = vst.msk [vmem:[#allocation2] sm:$0xff] %vm150, %v248
    %253 = vst.msk [vmem:[#allocation2 + $0x8] sm:$0xff] %vm150, %v249
    %254 = vst.msk [vmem:[#allocation2 + $0x10] sm:$0xff] %vm150, %v250
    %255 = vst.msk [vmem:[#allocation2 + $0x18] sm:$0xff] %vm150, %v251
    // Predicated region
    $region22: #{tpu_custom_call.1} parent=1 // pred_check
      _
    $region23: #{tpu_custom_call.1} parent=1 // pred_check_branch
      %257 = sbr.rel (0) target = $region25
    $region24: #{tpu_custom_call.1} parent=1 // pred_region
      %s259 = ssub.s32 512, 512
      %260 = vsyncadd [#allocation3], %s259
      %s261 = sshll.u32 [#allocation2], 4
      %s262 = int_to_ptr.vmem [resolvable:$true] %s261
      %267 = dma.vmem_to_hbm [thread:$0]  %s262, 512, %s5, [#allocation3], 128, 128, 8
    $region25: #{tpu_custom_call.1} parent=1 // pred_fallthru
      _
    // Predicated region
    $region26: #{tpu_custom_call.1} parent=1 // pred_check
      _
    $region27: #{tpu_custom_call.1} parent=1 // pred_check_branch
      %269 = sbr.rel (0) target = $region29
    $region28: #{tpu_custom_call.1} parent=1 // pred_region
      %270 = dma.done [#allocation3], 512
    $region29: #{tpu_custom_call.1} parent=1 // pred_fallthru
      _
    %271 = vsyncpa [#allocation3], 1

</llo_original>
